<compile_context>
chip_gen: v6e
topology: v6e:2x2x1
jax: 0.10.0
libtpu: 0.0.40
codegen_flags: <defaults>
</compile_context>

<pallas_src>
import functools

import jax
import jax.numpy as jnp
from jax.experimental import pallas as pl
from jax.experimental.pallas import tpu as pltpu


def _round_up(x, m):
    return ((x + m - 1) // m) * m


def _tpu_vmem_budgets():
    """Generation-aware (scoped-VMEM limit, live-tile budget) in bytes."""
    try:
        cap = int(pltpu.get_tpu_info().vmem_capacity_bytes)
    except Exception:
        # No hardware info available: assume the smallest VMEM (v7x-like, 64 MiB)
        cap = 64 * 1024 * 1024
    if cap >= 96 * 1024 * 1024:
        # v5e / v6e: 128 MiB per TensorCore -> big tiles, few grid steps.
        return 96 * 1024 * 1024, 56 * 1024 * 1024
    # v7x: 64 MiB per TensorCore -> leave headroom for Mosaic scratch.
    return 40 * 1024 * 1024, 18 * 1024 * 1024


_VMEM_LIMIT_BYTES, _TILE_VMEM_BUDGET = _tpu_vmem_budgets()


def _auto_tile_rows(n_rows, vocab, in_bytes, out_bytes):
    """Largest row tile (multiple of 8) fitting the VMEM budget."""
    # Peak per tile row: 2 double-buffered input tiles + 1 double-buffered
    # output tile + ~7 live (TR, V) f32 temporaries in the kernel body.
    per_row = vocab * (2 * in_bytes * 2 + out_bytes * 2 + 7 * 4) + 16
    tr = max(8, _TILE_VMEM_BUDGET // per_row)
    tr = min(tr, _round_up(n_rows, 8), 2048)
    tr = max(8, (tr // 8) * 8)
    # Prefer an even number of grid steps: the "parallel" axis shards across
    # the 2 TensorCores on megacore chips (v7x); ~free elsewhere (per-step
    # overhead is only ~0.35 us).
    steps = pl.cdiv(n_rows, tr)
    if steps > 1 and steps % 2 == 1:
        tr_even = max(8, _round_up(pl.cdiv(n_rows, steps + 1), 8))
        if pl.cdiv(n_rows, tr_even) % 2 == 0:
            tr = tr_even
    # TODO(synk): for very large vocabularies (per_row * 8 > budget) add a
    # second grid axis over V with online-softmax row stats instead of
    # flooring the row tile at 8 rows.
    return int(tr)


def _kl_div_kernel(p_ref, q_ref, mask_ref, o_ref):
    """Symmetric KL on one (TR, V) row tile.

    out = 0.5 * (softmax(p) - softmax(q)) * (log_softmax(p) - log_softmax(q))
        == 0.5 * (p_loss + q_loss) of the PyTorch module; zeroed where mask != 0.
    """
    p = p_ref[...].astype(jnp.float32)
    q = q_ref[...].astype(jnp.float32)

    # Numerically stable shifted logits (lane-axis reductions -> XLU).
    p_shift = p - jnp.max(p, axis=-1, keepdims=True)
    q_shift = q - jnp.max(q, axis=-1, keepdims=True)
    exp_p = jnp.exp(p_shift)
    exp_q = jnp.exp(q_shift)
    sum_p = jnp.sum(exp_p, axis=-1, keepdims=True)
    sum_q = jnp.sum(exp_q, axis=-1, keepdims=True)

    # log_softmax(p) - log_softmax(q), without materializing either log-softmax.
    d = (p_shift - q_shift) - (jnp.log(sum_p) - jnp.log(sum_q))

    # 0.5 folded into the per-row reciprocals; exps reused from the LSE sums.
    hp = 0.5 * pl.reciprocal(sum_p, approx=False)
    hq = 0.5 * pl.reciprocal(sum_q, approx=False)
    loss = (exp_p * hp - exp_q * hq) * d

    # mask_ref is (TR, 1) int32; nonzero -> padded row -> zero the whole row.
    keep = mask_ref[...] == 0
    loss = jnp.where(keep, loss, 0.0)

    o_ref[...] = loss.astype(o_ref.dtype)


@functools.partial(jax.jit, static_argnames=("tile_rows", "out_dtype"))
def _kl_div_loss_impl(p, q, mask2d, tile_rows, out_dtype):
    B, S, V = p.shape
    n_rows = B * S
    p2d = p.reshape(n_rows, V)
    q2d = q.reshape(n_rows, V)
    grid = (pl.cdiv(n_rows, tile_rows),)   # ragged last block handled in-kernel
    out2d = pl.pallas_call(
        _kl_div_kernel,
        out_shape=jax.ShapeDtypeStruct((n_rows, V), jnp.dtype(out_dtype)),
        grid_spec=pltpu.PrefetchScalarGridSpec(
            num_scalar_prefetch=0,
            grid=grid,
            in_specs=[
                pl.BlockSpec((tile_rows, V), lambda i: (i, 0)),
                pl.BlockSpec((tile_rows, V), lambda i: (i, 0)),
                pl.BlockSpec((tile_rows, 1), lambda i: (i, 0)),
            ],
            out_specs=pl.BlockSpec((tile_rows, V), lambda i: (i, 0)),
        ),
        compiler_params=pltpu.CompilerParams(
            dimension_semantics=("parallel",),
            vmem_limit_bytes=_VMEM_LIMIT_BYTES,
        ),
    )(p2d, q2d, mask2d)
    return out2d.reshape(B, S, V)


def kl_div_loss(p, q, pad_mask=None, tile_rows=None, out_dtype=None):
    """JAX/Pallas equivalent of KLDivLoss(reduction='none').forward((p, q), pad_mask).

    p, q:      (B, S, V) float arrays (softmax taken over the last axis).
    pad_mask:  optional (B, S) boolean; True rows get loss 0.
    out_dtype: output element dtype (default: p.dtype; pass jnp.float32 for
               bf16 inputs if downstream reductions need full precision).
    Returns:   (B, S, V) elementwise symmetric-KL loss.
    """
    B, S, V = p.shape
    n_rows = B * S
    out_dtype = jnp.dtype(out_dtype) if out_dtype is not None else jnp.dtype(p.dtype)

    in_bytes = max(jnp.dtype(p.dtype).itemsize, jnp.dtype(q.dtype).itemsize)
    if tile_rows is None:
        tile_rows = _auto_tile_rows(n_rows, V, in_bytes, out_dtype.itemsize)
    tile_rows = max(8, (int(tile_rows) // 8) * 8)

    if pad_mask is None:
        mask2d = jnp.zeros((n_rows, 1), dtype=jnp.int32)
    else:
        mask2d = pad_mask.reshape(n_rows, 1).astype(jnp.int32)

    return _kl_div_loss_impl(p, q, mask2d, tile_rows, out_dtype.name)


def _reference(p, q, pad_mask=None):
    """Pure-JAX reference mirroring the PyTorch module."""
    log_sm_p = jax.nn.log_softmax(p.astype(jnp.float32), axis=-1)
    log_sm_q = jax.nn.log_softmax(q.astype(jnp.float32), axis=-1)
    sm_p = jnp.exp(log_sm_p)
    sm_q = jnp.exp(log_sm_q)
    p_loss = sm_q * (log_sm_q - log_sm_p)
    q_loss = sm_p * (log_sm_p - log_sm_q)
    loss = 0.5 * (p_loss + q_loss)
    if pad_mask is not None:
        loss = jnp.where(pad_mask[..., None], 0.0, loss)
    return loss


if __name__ == "__main__":
    key = jax.random.PRNGKey(0)
    kp, kq, km = jax.random.split(key, 3)

    # Main check: small shapes consistent with the module (batch, seq, vocab).
    B, S, V = 2, 8, 32
    p = jax.random.normal(kp, (B, S, V), dtype=jnp.float32)
    q = jax.random.normal(kq, (B, S, V), dtype=jnp.float32)
    pad_mask = jax.random.bernoulli(km, p=0.25, shape=(B, S))

    out = jax.block_until_ready(kl_div_loss(p, q, pad_mask))
    ref = _reference(p, q, pad_mask)
    assert out.shape == (B, S, V)
    assert jnp.allclose(out, ref, atol=1e-5, rtol=1e-4)

    # Ragged check: B*S = 15 with an 8-row tile -> 2 grid steps, last block
    # partially out of bounds (no host-side padding; Pallas masks the stores).
    B2, S2, V2 = 3, 5, 160
    kp2, kq2 = jax.random.split(jax.random.PRNGKey(1), 2)
    p2 = jax.random.normal(kp2, (B2, S2, V2), dtype=jnp.float32)
    q2 = jax.random.normal(kq2, (B2, S2, V2), dtype=jnp.float32)
    out2 = jax.block_until_ready(kl_div_loss(p2, q2, tile_rows=8))
    ref2 = _reference(p2, q2)
    assert out2.shape == (B2, S2, V2)
    assert jnp.allclose(out2, ref2, atol=1e-5, rtol=1e-4)

    # Auto-tiled ragged case (single oversize block), no mask.
    out3 = jax.block_until_ready(kl_div_loss(p2, q2))
    assert jnp.allclose(out3, ref2, atol=1e-5, rtol=1e-4)

    print("KERNEL_OK")
</pallas_src>

<mosaic_0001>
module attributes {stable_mosaic.version = 11 : i64} {
  func.func @_kl_div_kernel(%arg0: i32, %arg1: memref<16x32xf32, #tpu.memory_space<vmem>>, %arg2: memref<16x32xf32, #tpu.memory_space<vmem>>, %arg3: memref<16x1xi32, #tpu.memory_space<vmem>>, %arg4: memref<16x32xf32, #tpu.memory_space<vmem>>) attributes {dimension_semantics = [#tpu.dimension_semantics<parallel>], iteration_bounds = array<i64: 1>, scalar_prefetch = 0 : i64, scratch_operands = 0 : i64, tpu.core_type = #tpu.core_type<tc>, window_params = [{transform_indices = @transform_0, window_bounds = array<i64: 16, 32>}, {transform_indices = @transform_1, window_bounds = array<i64: 16, 32>}, {transform_indices = @transform_2, window_bounds = array<i64: 16, 1>}, {transform_indices = @transform_3, window_bounds = array<i64: 16, 32>}]} {
    %c0 = arith.constant 0 : index
    %c0_0 = arith.constant 0 : index
    %0 = vector.load %arg1[%c0, %c0_0] : memref<16x32xf32, #tpu.memory_space<vmem>>, vector<16x32xf32>
    %c0_1 = arith.constant 0 : index
    %c0_2 = arith.constant 0 : index
    %1 = vector.load %arg2[%c0_1, %c0_2] : memref<16x32xf32, #tpu.memory_space<vmem>>, vector<16x32xf32>
    %cst = arith.constant dense<0xFF800000> : vector<16xf32>
    %2 = vector.multi_reduction <maximumf>, %0, %cst [1] : vector<16x32xf32> to vector<16xf32>
    %3 = vector.shape_cast %2 : vector<16xf32> to vector<16x1xf32>
    %4 = vector.broadcast %3 : vector<16x1xf32> to vector<16x32xf32>
    %5 = arith.subf %0, %4 : vector<16x32xf32>
    %cst_3 = arith.constant dense<0xFF800000> : vector<16xf32>
    %6 = vector.multi_reduction <maximumf>, %1, %cst_3 [1] : vector<16x32xf32> to vector<16xf32>
    %7 = vector.shape_cast %6 : vector<16xf32> to vector<16x1xf32>
    %8 = vector.broadcast %7 : vector<16x1xf32> to vector<16x32xf32>
    %9 = arith.subf %1, %8 : vector<16x32xf32>
    %10 = math.exp %5 : vector<16x32xf32>
    %11 = math.exp %9 : vector<16x32xf32>
    %cst_4 = arith.constant dense<0.000000e+00> : vector<16xf32>
    %12 = vector.multi_reduction <add>, %10, %cst_4 [1] : vector<16x32xf32> to vector<16xf32>
    %13 = vector.shape_cast %12 : vector<16xf32> to vector<16x1xf32>
    %cst_5 = arith.constant dense<0.000000e+00> : vector<16xf32>
    %14 = vector.multi_reduction <add>, %11, %cst_5 [1] : vector<16x32xf32> to vector<16xf32>
    %15 = vector.shape_cast %14 : vector<16xf32> to vector<16x1xf32>
    %16 = arith.subf %5, %9 : vector<16x32xf32>
    %17 = math.log %13 : vector<16x1xf32>
    %18 = math.log %15 : vector<16x1xf32>
    %19 = arith.subf %17, %18 : vector<16x1xf32>
    %20 = vector.broadcast %19 : vector<16x1xf32> to vector<16x32xf32>
    %21 = arith.subf %16, %20 : vector<16x32xf32>
    %22 = tpu.reciprocal %13 : vector<16x1xf32> -> vector<16x1xf32>
    %cst_6 = arith.constant 5.000000e-01 : f32
    %23 = vector.broadcast %cst_6 : f32 to vector<16x1xf32>
    %24 = arith.mulf %23, %22 : vector<16x1xf32>
    %25 = tpu.reciprocal %15 : vector<16x1xf32> -> vector<16x1xf32>
    %cst_7 = arith.constant 5.000000e-01 : f32
    %26 = vector.broadcast %cst_7 : f32 to vector<16x1xf32>
    %27 = arith.mulf %26, %25 : vector<16x1xf32>
    %28 = vector.broadcast %24 : vector<16x1xf32> to vector<16x32xf32>
    %29 = arith.mulf %10, %28 : vector<16x32xf32>
    %30 = vector.broadcast %27 : vector<16x1xf32> to vector<16x32xf32>
    %31 = arith.mulf %11, %30 : vector<16x32xf32>
    %32 = arith.subf %29, %31 : vector<16x32xf32>
    %33 = arith.mulf %32, %21 : vector<16x32xf32>
    %c0_8 = arith.constant 0 : index
    %c0_9 = arith.constant 0 : index
    %34 = vector.load %arg3[%c0_8, %c0_9] : memref<16x1xi32, #tpu.memory_space<vmem>>, vector<16x1xi32>
    %c0_i32 = arith.constant 0 : i32
    %35 = vector.broadcast %c0_i32 : i32 to vector<16x1xi32>
    %36 = arith.cmpi eq, %34, %35 : vector<16x1xi32>
    %cst_10 = arith.constant 0.000000e+00 : f32
    %37 = vector.shape_cast %36 : vector<16x1xi1> to vector<16x1xi1>
    %38 = vector.broadcast %37 : vector<16x1xi1> to vector<16x32xi1>
    %39 = vector.broadcast %cst_10 : f32 to vector<16x32xf32>
    %40 = arith.select %38, %33, %39 : vector<16x32xi1>, vector<16x32xf32>
    %c0_11 = arith.constant 0 : index
    %c0_12 = arith.constant 0 : index
    %41 = vector.load %arg4[%c0_11, %c0_12] : memref<16x32xf32, #tpu.memory_space<vmem>>, vector<16x32xf32>
    tpu.vector_store %arg4[%c0_11, %c0_12], %40 {strides = array<i32>} : memref<16x32xf32, #tpu.memory_space<vmem>>, vector<16x32xf32>,
    return
  }
  func.func @transform_0(%arg0: i32) -> (i32, i32) {
    %c0_i32 = arith.constant 0 : i32
    %c0_i32_0 = arith.constant 0 : i32
    return %arg0, %c0_i32 : i32, i32
  }
  func.func @transform_1(%arg0: i32) -> (i32, i32) {
    %c0_i32 = arith.constant 0 : i32
    %c0_i32_0 = arith.constant 0 : i32
    return %arg0, %c0_i32 : i32, i32
  }
  func.func @transform_2(%arg0: i32) -> (i32, i32) {
    %c0_i32 = arith.constant 0 : i32
    %c0_i32_0 = arith.constant 0 : i32
    return %arg0, %c0_i32 : i32, i32
  }
  func.func @transform_3(%arg0: i32) -> (i32, i32) {
    %c0_i32 = arith.constant 0 : i32
    %c0_i32_0 = arith.constant 0 : i32
    return %arg0, %c0_i32 : i32, i32
  }
}

</mosaic_0001>

<llo_original>
// kernel: _kl_div_loss_impl.1
$region0: #{_kl_div_loss_impl.1}
  #allocation0 [shape = 'u32[]', space=smem, size = 0x4, offset = 0x4, fixed_abs, tag = 'smem constant byte address 0x4 - core index']
  #allocation1 [shape = 'u32[144,128]{1,0:T(1,128)}', space=vmem, size = 0x12000, scoped, tag = 'internal scratch']
  %s0 = inlined_call_operand.vmem [shape: f32[16,32], index: 0, kind: input, shape index: {}]
  %s1 = inlined_call_operand.hbm [shape: f32[16,32], index: 1, kind: input, shape index: {}]
  %s2 = inlined_call_operand.vmem [shape: s32[16,1], index: 2, kind: input, shape index: {}]
  %s3 = inlined_call_operand.hbm [shape: f32[16,32], index: 3, kind: output, shape index: {}]
  %s4 = sld [smem:[#allocation0]]
  $region26: #{_kl_div_loss_impl.1} parent=0
    _
  %s6 = ssub.s32 1, %s4
  %s7 = scalar_select 0, %s6, %s4
  $region1: #{_kl_div_loss_impl.1} parent=0
    #allocation2 [shape = 'u8[8192]{0}', space=vmem, size = 0x2000, scoped, tag = 'input window, operand 1, single buffered']
    #allocation3 [shape = 's32[1]{0}', space=sflag, size = 0x4, scoped, tag = 'scoped memory for _kl_div_loss_impl.1']
    #allocation4 [shape = 's32[1]{0}', space=sflag, size = 0x4, scoped, tag = 'scoped memory for _kl_div_loss_impl.1']
    #allocation5 [shape = 'u8[8192]{0}', space=vmem, size = 0x2000, scoped, tag = 'output window, operand 0, single buffered']
    %8 = vsyncpa [#allocation3], 0
    %9 = vsyncpa [#allocation4], 0
    // Predicated region
    $region2: #{_kl_div_loss_impl.1} parent=1 // pred_check
      _
    $region3: #{_kl_div_loss_impl.1} parent=1 // pred_check_branch
      %11 = sbr.rel (0) target = $region5
    $region4: #{_kl_div_loss_impl.1} parent=1 // pred_region
      _
    $region5: #{_kl_div_loss_impl.1} parent=1 // pred_fallthru
      _
    // Predicated region
    $region6: #{_kl_div_loss_impl.1} parent=1 // pred_check
      _
    $region7: #{_kl_div_loss_impl.1} parent=1 // pred_check_branch
      %13 = sbr.rel (0) target = $region9
    $region8: #{_kl_div_loss_impl.1} parent=1 // pred_region
      %s15 = ssub.s32 256, 256
      %16 = vsyncadd [#allocation3], %s15
      %s17 = sshll.u32 [#allocation2], 4
      %s18 = int_to_ptr.vmem [resolvable:$true] %s17
      %23 = dma.hbm_to_vmem [thread:$0]  %s1, 256, %s18, [#allocation3], 128, 128, 8
    $region9: #{_kl_div_loss_impl.1} parent=1 // pred_fallthru
      _
    // Predicated region
    $region10: #{_kl_div_loss_impl.1} parent=1 // pred_check
      _
    $region11: #{_kl_div_loss_impl.1} parent=1 // pred_check_branch
      %25 = sbr.rel (0) target = $region13
    $region12: #{_kl_div_loss_impl.1} parent=1 // pred_region
      _
    $region13: #{_kl_div_loss_impl.1} parent=1 // pred_fallthru
      _
    // Predicated region
    $region14: #{_kl_div_loss_impl.1} parent=1 // pred_check
      _
    $region15: #{_kl_div_loss_impl.1} parent=1 // pred_check_branch
      %27 = sbr.rel (0) target = $region17
    $region16: #{_kl_div_loss_impl.1} parent=1 // pred_region
      %28 = dma.done [#allocation3], 256
    $region17: #{_kl_div_loss_impl.1} parent=1 // pred_fallthru
      _
    %v29 = vld [vmem:[%s0] sm:$0xff]
    %v30 = vld [vmem:[%s0 + $0x8] sm:$0xff]
    %v31 = vld [vmem:[#allocation2] sm:$0xff]
    %v32 = vld [vmem:[#allocation2 + $0x8] sm:$0xff]
    %vm33 = vcmask 261120
    %v34 = vsel %vm33, %v29, -inf
    %35 = vmax.xlane.f32.xlu0 %v34
    %v36 = vpop.xlane.xlu0 %35
    %v37 = vsel %vm33, %v30, -inf
    %38 = vmax.xlane.f32.xlu0 %v37
    %v39 = vpop.xlane.xlu0 %38
    %v40 = vsub.f32 %v29, %v36
    %v41 = vsub.f32 %v30, %v39
    %v42 = vsel %vm33, %v31, -inf
    %43 = vmax.xlane.f32.xlu0 %v42
    %v44 = vpop.xlane.xlu0 %43
    %v45 = vsel %vm33, %v32, -inf
    %46 = vmax.xlane.f32.xlu0 %v45
    %v47 = vpop.xlane.xlu0 %46
    %v48 = vsub.f32 %v31, %v44
    %v49 = vsub.f32 %v32, %v47
    %v50 = vmul.f32 %v40, 1.442695
    %v51 = vpow.pop %v50
    %v52 = vmul.f32 %v41, 1.442695
    %v53 = vpow.pop %v52
    %v54 = vmul.f32 %v48, 1.442695
    %v55 = vpow.pop %v54
    %v56 = vmul.f32 %v49, 1.442695
    %v57 = vpow.pop %v56
    %v58 = vsel %vm33, %v51, 0.0
    %59 = vadd.xlane.f32.xlu0 %v58
    %v60 = vpop.xlane.xlu0 %59
    %v61 = vsel %vm33, %v53, 0.0
    %62 = vadd.xlane.f32.xlu0 %v61
    %v63 = vpop.xlane.xlu0 %62
    %v64 = vsel %vm33, %v55, 0.0
    %65 = vadd.xlane.f32.xlu0 %v64
    %v66 = vpop.xlane.xlu0 %65
    %v67 = vsel %vm33, %v57, 0.0
    %68 = vadd.xlane.f32.xlu0 %v67
    %v69 = vpop.xlane.xlu0 %68
    %v70 = vsub.f32 %v40, %v48
    %v71 = vsub.f32 %v41, %v49
    %v72 = vlog2.pop %v60
    %v73 = vmul.f32 %v72, 0.6931472
    %v74 = vlog2.pop %v63
    %v75 = vmul.f32 %v74, 0.6931472
    %v76 = vlog2.pop %v66
    %v77 = vmul.f32 %v76, 0.6931472
    %v78 = vlog2.pop %v69
    %v79 = vmul.f32 %v78, 0.6931472
    %v80 = vsub.f32 %v73, %v77
    %v81 = vsub.f32 %v75, %v79
    %v82 = vsub.f32 %v70, %v80
    %v83 = vsub.f32 %v71, %v81
    %v84 = vrcp.pop %v60
    %v85 = vrcp.pop %v63
    %v86 = vmul.f32 %v84, 0.5
    %v87 = vmul.f32 %v85, 0.5
    %v88 = vrcp.pop %v66
    %v89 = vrcp.pop %v69
    %v90 = vmul.f32 %v88, 0.5
    %v91 = vmul.f32 %v89, 0.5
    %v92 = vmul.f32 %v51, %v86
    %v93 = vmul.f32 %v53, %v87
    %v94 = vmul.f32 %v55, %v90
    %v95 = vmul.f32 %v57, %v91
    %v96 = vsub.f32 %v92, %v94
    %v97 = vsub.f32 %v93, %v95
    %v98 = vmul.f32 %v96, %v82
    %v99 = vmul.f32 %v97, %v83
    %v100 = vld [vmem:[%s2] sm:$0xff]
    %v101 = vld [vmem:[%s2 + $0x8] sm:$0xff]
    %vm102 = vcmp.eq.s32.totalorder %v100, 0
    %vm103 = vcmp.eq.s32.totalorder %v101, 0
    %v104 = vsel %vm102, 1, 0
    %v105 = vsel %vm103, 1, 0
    %106 = vset.pattern.permute.xlu0 0
    %107 = vperm.xlu0 %106, %v104
    %v108 = vpop.permute.xlu0 %107
    %109 = vset.pattern.permute.xlu0 0
    %110 = vperm.xlu0 %109, %v105
    %v111 = vpop.permute.xlu0 %110
    %vm112 = vcmp.eq.s32.totalorder %v108, 1
    %vm113 = vcmp.eq.s32.totalorder %v111, 1
    %v114 = vsel %vm112, %v98, 0.0
    %v115 = vsel %vm113, %v99, 0.0
    %116 = vst.msk [vmem:[#allocation5] sm:$0xff] %vm33, %v114
    %117 = vst.msk [vmem:[#allocation5 + $0x8] sm:$0xff] %vm33, %v115
    // Predicated region
    $region18: #{_kl_div_loss_impl.1} parent=1 // pred_check
      _
    $region19: #{_kl_div_loss_impl.1} parent=1 // pred_check_branch
      %119 = sbr.rel (0) target = $region21
    $region20: #{_kl_div_loss_impl.1} parent=1 // pred_region
      %s121 = ssub.s32 256, 256
      %122 = vsyncadd [#allocation4], %s121
      %s123 = sshll.u32 [#allocation5], 4
      %s124 = int_to_ptr.vmem [resolvable:$true] %s123
      %129 = dma.vmem_to_hbm [thread:$0]  %s124, 256, %s3, [#allocation4], 128, 128, 8
    $region21: #{_kl_div_loss_impl.1} parent=1 // pred_fallthru
      _
    // Predicated region
    $region22: #{_kl_div_loss_impl.1} parent=1 // pred_check
      _
    $region23: #{_kl_div_loss_impl.1} parent=1 // pred_check_branch
      %131 = sbr.rel (0) target = $region25
    $region24: #{_kl_div_loss_impl.1} parent=1 // pred_region
      %132 = dma.done [#allocation4], 256
    $region25: #{_kl_div_loss_impl.1} parent=1 // pred_fallthru
      _
    %133 = vsyncpa [#allocation3], 1
    %134 = vsyncpa [#allocation4], 1

</llo_original>
